<compile_context>
chip_gen: v6e
topology: v6e:2x2x1
jax: 0.10.0
libtpu: 0.0.40
codegen_flags: <defaults>
</compile_context>

<pallas_src>
import functools

import jax
import jax.numpy as jnp
import numpy as np
from jax.experimental import pallas as pl
from jax.experimental.pallas import tpu as pltpu

LANES = 128
DEFAULT_BLOCK_BYTES = 2 * 1024 * 1024   # ~2 MiB of input streamed per grid step


def _l2_block_kernel(x_ref, out_ref, *, rows, row_block, cols, needs_mask):
    """One grid step: emit an (8, cols) partial sum-of-squares for this row block.

    x_ref   : VMEM (row_block, cols)  current streamed block (input dtype)
    out_ref : VMEM (8, cols) f32      this block's partial sum of squares
    """
    xb = x_ref[...].astype(jnp.float32)

    if needs_mask:
        # Only the last block is ragged; elsewhere the compare is all-true.
        # Cheap VPU work, fully hidden under the HBM DMA.
        i = pl.program_id(0)
        valid = rows - i * row_block
        ridx = jax.lax.broadcasted_iota(jnp.int32, (row_block, cols), 0)
        xb = jnp.where(ridx < valid, xb, 0.0)

    sq = xb * xb

    if row_block % 8 == 0:
        # Pure VPU: collapse the vreg-group axis with register-resident adds.
        part = jnp.sum(sq.reshape(row_block // 8, 8, cols), axis=0)
    else:
        # Tiny single-block fallback (row_block == rows, not a multiple of 8).
        row0 = jax.lax.broadcasted_iota(jnp.int32, (8, cols), 0) == 0
        part = jnp.where(row0, jnp.sum(sq, axis=0, keepdims=True), 0.0)

    out_ref[...] = part


def sparse_l2_regularization(x, l2_lambda, block_bytes=DEFAULT_BLOCK_BYTES):
    """Pallas equivalent of SparseL2Regularization(l2_lambda)(x) -> 0-d f32 array."""
    n = int(x.size)
    if n == 0:
        return jnp.zeros((), jnp.float32)

    # Zero-copy 2-D view of the contiguous row-major input (no pad, no HBM copy).
    if n % LANES == 0:
        cols = LANES                  # lane-dense view
    else:
        cols = int(x.shape[-1])       # last dim == full array dim is always legal
    rows = n // cols
    x2d = x.reshape(rows, cols)

    itemsize = x.dtype.itemsize
    sub = max(8, 32 // itemsize)      # packed sublane tile: 8 f32 / 16 bf16 / 32 int8
    rb_budget = max(1, block_bytes // (cols * itemsize))
    if rb_budget >= rows:
        row_block = rows              # single block covering everything
    else:
        row_block = min(rows, max(sub, (rb_budget // sub) * sub))
    n_blocks = pl.cdiv(rows, row_block)
    needs_mask = (rows % row_block) != 0

    kernel = functools.partial(
        _l2_block_kernel, rows=rows, row_block=row_block, cols=cols,
        needs_mask=needs_mask)

    partials = pl.pallas_call(
        kernel,
        out_shape=jax.ShapeDtypeStruct((n_blocks * 8, cols), jnp.float32),
        grid_spec=pltpu.PrefetchScalarGridSpec(
            num_scalar_prefetch=0,
            grid=(n_blocks,),
            in_specs=[pl.BlockSpec((row_block, cols), lambda i: (i, 0))],
            out_specs=pl.BlockSpec((8, cols), lambda i: (i, 0)),
        ),
        compiler_params=pltpu.CompilerParams(
            dimension_semantics=("parallel",)),   # blocks independent -> both TCs on v7x
    )(x2d)

    # Final combine (a few KiB), sqrt, and lambda scale are free in the wrapper.
    total = jnp.sum(partials)
    return (jnp.float32(l2_lambda) * jnp.sqrt(total)).astype(jnp.float32)


def _reference(x, l2_lambda):
    return l2_lambda * jnp.sqrt(jnp.sum(jnp.square(x.astype(jnp.float32))))


if __name__ == "__main__":
    key = jax.random.PRNGKey(0)
    k1, k2, k3, k4 = jax.random.split(key, 4)
    lam = 0.01

    def check(x, **kw):
        got = jax.block_until_ready(sparse_l2_regularization(x, lam, **kw))
        want = _reference(x, lam)
        np.testing.assert_allclose(np.asarray(got), np.asarray(want),
                                   rtol=1e-4, atol=1e-6)

    # Lane-divisible element count (cols = 128), single block.
    check(jax.random.normal(k1, (2, 4, 16, 16), jnp.float32))
    # Non-lane-divisible count -> cols = last dim (310), single block.
    check(jax.random.normal(k2, (8, 62, 310), jnp.float32))
    # Multi-block "parallel" grid with a masked ragged last block (cols = 310).
    check(jax.random.normal(k2, (8, 62, 310), jnp.float32), block_bytes=128 * 310 * 4)
    # Multi-block lane-dense path with a masked ragged last block (cols = 128).
    check(jax.random.normal(k3, (4, 8, 64, 64), jnp.float32), block_bytes=96 * 128 * 4)
    # DGCNN adjacency-like tiny matrix (rows not a multiple of 8 -> fallback reduce).
    check(jax.random.normal(k4, (62, 62), jnp.float32))
    # bf16 input (packed sublane tile handling; accumulation stays in f32).
    check(jax.random.normal(k1, (2, 4, 16, 16), jnp.float32).astype(jnp.bfloat16))

    print("KERNEL_OK")
</pallas_src>

<mosaic_0001>
module attributes {stable_mosaic.version = 11 : i64} {
  func.func @_l2_block_kernel(%arg0: i32, %arg1: memref<16x128xf32, #tpu.memory_space<vmem>>, %arg2: memref<8x128xf32, #tpu.memory_space<vmem>>) attributes {dimension_semantics = [#tpu.dimension_semantics<parallel>], iteration_bounds = array<i64: 1>, scalar_prefetch = 0 : i64, scratch_operands = 0 : i64, tpu.core_type = #tpu.core_type<tc>, window_params = [{transform_indices = @transform_0, window_bounds = array<i64: 16, 128>}, {transform_indices = @transform_1, window_bounds = array<i64: 8, 128>}]} {
    %c0 = arith.constant 0 : index
    %c0_0 = arith.constant 0 : index
    %0 = vector.load %arg1[%c0, %c0_0] : memref<16x128xf32, #tpu.memory_space<vmem>>, vector<16x128xf32>
    %1 = arith.mulf %0, %0 : vector<16x128xf32>
    %2 = vector.shape_cast %1 : vector<16x128xf32> to vector<2x8x128xf32>
    %cst = arith.constant dense<0.000000e+00> : vector<8x128xf32>
    %3 = vector.multi_reduction <add>, %2, %cst [0] : vector<2x8x128xf32> to vector<8x128xf32>
    %c0_1 = arith.constant 0 : index
    %c0_2 = arith.constant 0 : index
    %4 = vector.load %arg2[%c0_1, %c0_2] : memref<8x128xf32, #tpu.memory_space<vmem>>, vector<8x128xf32>
    tpu.vector_store %arg2[%c0_1, %c0_2], %3 {strides = array<i32>} : memref<8x128xf32, #tpu.memory_space<vmem>>, vector<8x128xf32>,
    return
  }
  func.func @transform_0(%arg0: i32) -> (i32, i32) {
    %c0_i32 = arith.constant 0 : i32
    %c0_i32_0 = arith.constant 0 : i32
    return %arg0, %c0_i32 : i32, i32
  }
  func.func @transform_1(%arg0: i32) -> (i32, i32) {
    %c0_i32 = arith.constant 0 : i32
    %c0_i32_0 = arith.constant 0 : i32
    return %arg0, %c0_i32 : i32, i32
  }
}

</mosaic_0001>

<llo_original>
// kernel: tpu_custom_call.1
$region0: #{tpu_custom_call.1}
  #allocation0 [shape = 'u32[]', space=smem, size = 0x4, offset = 0x4, fixed_abs, tag = 'smem constant byte address 0x4 - core index']
  #allocation1 [shape = 'u32[144,128]{1,0:T(1,128)}', space=vmem, size = 0x12000, scoped, tag = 'internal scratch']
  %s0 = inlined_call_operand.hbm [shape: f32[16,128], index: 0, kind: input, shape index: {}]
  %s1 = inlined_call_operand.hbm [shape: f32[8,128], index: 1, kind: output, shape index: {}]
  %s2 = sld [smem:[#allocation0]]
  $region18: #{tpu_custom_call.1} parent=0
    _
  %s4 = ssub.s32 1, %s2
  %s5 = scalar_select 0, %s4, %s2
  $region1: #{tpu_custom_call.1} parent=0
    #allocation2 [shape = 'u8[8192]{0}', space=vmem, size = 0x2000, scoped, tag = 'input window, operand 0, single buffered']
    #allocation3 [shape = 's32[1]{0}', space=sflag, size = 0x4, scoped, tag = 'scoped memory for tpu_custom_call.1']
    #allocation4 [shape = 's32[1]{0}', space=sflag, size = 0x4, scoped, tag = 'scoped memory for tpu_custom_call.1']
    #allocation5 [shape = 'u8[4096]{0}', space=vmem, size = 0x1000, scoped, tag = 'output window, operand 0, single buffered']
    %6 = vsyncpa [#allocation3], 0
    %7 = vsyncpa [#allocation4], 0
    // Predicated region
    $region2: #{tpu_custom_call.1} parent=1 // pred_check
      _
    $region3: #{tpu_custom_call.1} parent=1 // pred_check_branch
      %9 = sbr.rel (0) target = $region5
    $region4: #{tpu_custom_call.1} parent=1 // pred_region
      %s11 = ssub.s32 256, 256
      %12 = vsyncadd [#allocation3], %s11
      %s13 = sshll.u32 [#allocation2], 4
      %s14 = int_to_ptr.vmem [resolvable:$true] %s13
      %19 = dma.hbm_to_vmem [thread:$0]  %s0, 256, %s14, [#allocation3], 128, 128, 8
    $region5: #{tpu_custom_call.1} parent=1 // pred_fallthru
      _
    // Predicated region
    $region6: #{tpu_custom_call.1} parent=1 // pred_check
      _
    $region7: #{tpu_custom_call.1} parent=1 // pred_check_branch
      %21 = sbr.rel (0) target = $region9
    $region8: #{tpu_custom_call.1} parent=1 // pred_region
      %22 = dma.done [#allocation3], 256
    $region9: #{tpu_custom_call.1} parent=1 // pred_fallthru
      _
    %v23 = vld [vmem:[#allocation2] sm:$0xff]
    %v24 = vld [vmem:[#allocation2 + $0x8] sm:$0xff]
    %v25 = vmul.f32 %v23, %v23
    %v26 = vmul.f32 %v24, %v24
    %v27 = vadd.f32 %v25, %v26
    %28 = vst [vmem:[#allocation5] sm:$0xff] %v27
    // Predicated region
    $region10: #{tpu_custom_call.1} parent=1 // pred_check
      _
    $region11: #{tpu_custom_call.1} parent=1 // pred_check_branch
      %30 = sbr.rel (0) target = $region13
    $region12: #{tpu_custom_call.1} parent=1 // pred_region
      %s32 = ssub.s32 128, 128
      %33 = vsyncadd [#allocation4], %s32
      %s35 = sshll.u32 [#allocation5], 4
      %s36 = int_to_ptr.vmem [resolvable:$true] %s35
      %38 = dma.vmem_to_hbm [thread:$0]  %s36, 128, %s1, [#allocation4]
    $region13: #{tpu_custom_call.1} parent=1 // pred_fallthru
      _
    // Predicated region
    $region14: #{tpu_custom_call.1} parent=1 // pred_check
      _
    $region15: #{tpu_custom_call.1} parent=1 // pred_check_branch
      %40 = sbr.rel (0) target = $region17
    $region16: #{tpu_custom_call.1} parent=1 // pred_region
      %41 = dma.done [#allocation4], 128
    $region17: #{tpu_custom_call.1} parent=1 // pred_fallthru
      _
    %42 = vsyncpa [#allocation3], 1
    %43 = vsyncpa [#allocation4], 1

</llo_original>
